<compile_context>
chip_gen: v6e
topology: v6e:2x2x1
jax: 0.10.0
libtpu: 0.0.40
codegen_flags: <defaults>
</compile_context>

<pallas_src>
import math
from functools import partial

import jax
import jax.numpy as jnp
from jax.experimental import pallas as pl
from jax.experimental.pallas import tpu as pltpu


def _round_up(x, m):
    return ((x + m - 1) // m) * m


# -----------------------------------------------------------------------------
# Kernel: grid (row tiles, k tiles), reduction axis last.
#   acc += A^T[row_tile, k_tile] @ XW[k_tile, Fo]        (MXU, f32 accumulate)
#   at k==last:  out = act(acc * right_rows + b_fold)    (VPU epilogue, free)
# -----------------------------------------------------------------------------
def _gcn_layer_kernel(a_ref, xw_ref, right_ref, b_ref, o_ref, acc_ref, *, activation):
    k = pl.program_id(1)

    @pl.when(k == 0)
    def _():
        acc_ref[...] = jnp.zeros_like(acc_ref)

    a = a_ref[...].astype(jnp.bfloat16)          # int8 (exact 0/1) -> bf16, hidden under DMA
    acc_ref[...] += jnp.dot(a, xw_ref[...], preferred_element_type=jnp.float32)

    @pl.when(k == pl.num_programs(1) - 1)
    def _():
        rst = acc_ref[...] * right_ref[...] + b_ref[...]
        if activation is not None:
            rst = activation(rst)
        o_ref[...] = rst.astype(o_ref.dtype)


# -----------------------------------------------------------------------------
# Jitted compute path (everything fused into one XLA program around the kernel).
# -----------------------------------------------------------------------------
@partial(jax.jit, static_argnames=("norm", "activation", "batch_norm", "bn_eps",
                                   "row_tile", "k_tile", "out_dtype", "adj_dtype"))
def _gcn_layer_impl(A, feat, weight, bias, bn_gamma, bn_beta, bn_mean, bn_var, *,
                    norm, activation, batch_norm, bn_eps,
                    row_tile, k_tile, out_dtype, adj_dtype):
    A = A.astype(jnp.float32)
    feat = feat.astype(jnp.float32)
    N = A.shape[0]
    in_feats = feat.shape[1]
    out_feats = weight.shape[1]

    # --- degree norms -------------------------------------------------------
    ones = jnp.ones((N,), jnp.float32)
    if norm in ("left", "both"):
        d = jnp.clip(A.sum(axis=1), 1.0)                 # out-degree (src)
        left = d ** -0.5 if norm == "both" else 1.0 / d
    else:
        left = ones
    if norm in ("right", "both"):
        d = jnp.clip(A.sum(axis=0), 1.0)                 # in-degree (dst)
        right = d ** -0.5 if norm == "both" else 1.0 / d
    else:
        right = ones

    # --- fold bias + eval-mode BatchNorm into W / b --------------------------
    w_fold = weight.astype(jnp.float32)
    b_fold = (jnp.zeros((out_feats,), jnp.float32) if bias is None
              else bias.astype(jnp.float32))
    if batch_norm:
        scale = bn_gamma.astype(jnp.float32) / jnp.sqrt(bn_var.astype(jnp.float32) + bn_eps)
        shift = bn_beta.astype(jnp.float32) - bn_mean.astype(jnp.float32) * scale
        w_fold = w_fold * scale[None, :]
        b_fold = b_fold * scale + shift

    # --- small projected-feature matrix (left norm folded in) ----------------
    xw = (feat * left[:, None]) @ w_fold                 # (N, out_feats), f32

    # --- padding / tiling (static under jit) ---------------------------------
    assert row_tile % 128 == 0 and k_tile % 128 == 0
    n_pad = _round_up(N, row_tile)
    fo_pad = _round_up(out_feats, 128)
    kt = min(k_tile, n_pad)
    if n_pad % kt:
        kt = math.gcd(n_pad, kt)                         # stays a multiple of 128

    # ONE fused pad + transpose + narrow-cast pass for the dominant stream.
    a_t = jnp.pad(A, ((0, n_pad - N), (0, n_pad - N))).T.astype(adj_dtype)
    xw_p = jnp.pad(xw, ((0, n_pad - N), (0, fo_pad - out_feats))).astype(jnp.bfloat16)
    right_p = jnp.pad(right, (0, n_pad - N)).reshape(n_pad, 1)
    b_p = jnp.pad(b_fold, (0, fo_pad - out_feats)).reshape(1, fo_pad)

    grid = (n_pad // row_tile, n_pad // kt)

    a_bytes = jnp.dtype(adj_dtype).itemsize
    o_bytes = jnp.dtype(out_dtype).itemsize
    cost = pl.CostEstimate(
        flops=2 * n_pad * n_pad * fo_pad,
        bytes_accessed=(n_pad * n_pad * a_bytes
                        + grid[0] * n_pad * fo_pad * 2
                        + n_pad * fo_pad * o_bytes),
        transcendentals=0,
    )

    out = pl.pallas_call(
        partial(_gcn_layer_kernel, activation=activation),
        grid=grid,
        in_specs=[
            pl.BlockSpec((row_tile, kt), lambda i, k: (i, k)),     # A^T tile (int8)
            pl.BlockSpec((kt, fo_pad), lambda i, k: (k, 0)),       # XW tile (bf16)
            pl.BlockSpec((row_tile, 1), lambda i, k: (i, 0)),      # right norm rows
            pl.BlockSpec((1, fo_pad), lambda i, k: (0, 0)),        # folded bias
        ],
        out_specs=pl.BlockSpec((row_tile, fo_pad), lambda i, k: (i, 0)),
        out_shape=jax.ShapeDtypeStruct((n_pad, fo_pad), out_dtype),
        scratch_shapes=[pltpu.VMEM((row_tile, fo_pad), jnp.float32)],
        compiler_params=pltpu.CompilerParams(
            dimension_semantics=("parallel", "arbitrary"),
            vmem_limit_bytes=32 * 1024 * 1024,
        ),
        cost_estimate=cost,
    )(a_t, xw_p, right_p, b_p)

    # NOTE: padded rows of the (n_pad, fo_pad) buffer contain act(b_fold), not zeros;
    # they are sliced off here.
    return out[:N, :out_feats]


# -----------------------------------------------------------------------------
# Public wrapper: argument checks (including the optional 0-in-degree check,
# kept OUTSIDE the jitted compute path so _gcn_layer_impl stays jittable).
# -----------------------------------------------------------------------------
def gcn_layer(A, feat, weight, bias=None, *, norm="both", activation=None,
              batch_norm=False, bn_gamma=None, bn_beta=None, bn_mean=None,
              bn_var=None, bn_eps=1e-5, allow_zero_in_degree=False,
              row_tile=128, k_tile=512, out_dtype=jnp.float32,
              adj_dtype=jnp.int8):
    if norm not in ("none", "both", "right", "left"):
        raise KeyError(f'Invalid norm value "{norm}".')
    if not allow_zero_in_degree:
        # Host-side debug check (forces one device->host sync); the jitted compute
        # path below never does a python-bool conversion.
        if bool(jnp.any(jnp.sum(A.astype(jnp.float32), axis=0) == 0)):
            raise KeyError("There are 0-in-degree nodes in the graph.")
    return _gcn_layer_impl(
        A, feat, weight, bias, bn_gamma, bn_beta, bn_mean, bn_var,
        norm=norm, activation=activation, batch_norm=batch_norm, bn_eps=bn_eps,
        row_tile=row_tile, k_tile=k_tile, out_dtype=out_dtype,
        adj_dtype=adj_dtype)


# -----------------------------------------------------------------------------
# Pure-JAX reference that follows the PyTorch/DGL forward exactly (f32).
# -----------------------------------------------------------------------------
def reference_gcn_layer(A, feat, weight, bias, *, norm, activation, batch_norm,
                        bn_gamma, bn_beta, bn_mean, bn_var, bn_eps=1e-5):
    A = A.astype(jnp.float32)
    in_feats, out_feats = weight.shape
    h = feat.astype(jnp.float32)
    if norm in ("left", "both"):
        d = jnp.clip(A.sum(axis=1), 1.0)
        nl = d ** -0.5 if norm == "both" else 1.0 / d
        h = h * nl[:, None]
    if in_feats > out_feats:
        h = h @ weight
        rst = A.T @ h
    else:
        rst = A.T @ h
        rst = rst @ weight
    if norm in ("right", "both"):
        d = jnp.clip(A.sum(axis=0), 1.0)
        nr = d ** -0.5 if norm == "both" else 1.0 / d
        rst = rst * nr[:, None]
    if bias is not None:
        rst = rst + bias
    if batch_norm:
        scale = bn_gamma / jnp.sqrt(bn_var + bn_eps)
        rst = (rst - bn_mean) * scale + bn_beta
    if activation is not None:
        rst = activation(rst)
    return rst


if __name__ == "__main__":
    key = jax.random.PRNGKey(0)
    k_feat, k_w, k_b, k_g, k_bt, k_m, k_v = jax.random.split(key, 7)

    N, in_feats, out_feats = 200, 16, 8   # -> n_pad=256, grid=(2, 1)

    # deterministic graph: undirected ring + self-loops (every node has in-degree 3)
    idx = jnp.arange(N)
    A = ((idx[:, None] == idx[None, :])
         | (((idx[:, None] + 1) % N) == idx[None, :])
         | (idx[:, None] == ((idx[None, :] + 1) % N))).astype(jnp.float32)

    feat = jax.random.normal(k_feat, (N, in_feats), jnp.float32)
    bound = math.sqrt(6.0 / (in_feats + out_feats))        # xavier_uniform
    weight = jax.random.uniform(k_w, (in_feats, out_feats), jnp.float32, -bound, bound)
    bias = 0.1 * jax.random.normal(k_b, (out_feats,), jnp.float32)
    bn_gamma = 1.0 + 0.1 * jax.random.normal(k_g, (out_feats,), jnp.float32)
    bn_beta = 0.1 * jax.random.normal(k_bt, (out_feats,), jnp.float32)
    bn_mean = 0.1 * jax.random.normal(k_m, (out_feats,), jnp.float32)
    bn_var = 1.0 + 0.1 * jax.random.uniform(k_v, (out_feats,), jnp.float32)

    configs = [
        dict(norm="both", activation=jax.nn.relu, batch_norm=True),
        dict(norm="right", activation=None, batch_norm=False),
        dict(norm="left", activation=jax.nn.relu, batch_norm=False),
    ]
    for cfg in configs:
        out = gcn_layer(A, feat, weight, bias,
                        norm=cfg["norm"], activation=cfg["activation"],
                        batch_norm=cfg["batch_norm"],
                        bn_gamma=bn_gamma, bn_beta=bn_beta,
                        bn_mean=bn_mean, bn_var=bn_var)
        out = jax.block_until_ready(out)

        ref = reference_gcn_layer(A, feat, weight, bias,
                                  norm=cfg["norm"], activation=cfg["activation"],
                                  batch_norm=cfg["batch_norm"],
                                  bn_gamma=bn_gamma, bn_beta=bn_beta,
                                  bn_mean=bn_mean, bn_var=bn_var)
        assert out.shape == (N, out_feats)
        assert bool(jnp.all(jnp.isfinite(out)))
        # int8 adjacency is exact; only the bf16 XW cast loses precision vs. the f32 ref
        assert bool(jnp.allclose(out, ref, atol=5e-2, rtol=5e-2)), \
            float(jnp.max(jnp.abs(out - ref)))

    print("KERNEL_OK")
</pallas_src>

<mosaic_0001>
module attributes {stable_mosaic.version = 11 : i64} {
  func.func @_gcn_layer_kernel(%arg0: i32, %arg1: i32, %arg2: memref<128x256xi8, #tpu.memory_space<vmem>>, %arg3: memref<256x128xbf16, #tpu.memory_space<vmem>>, %arg4: memref<128x1xf32, #tpu.memory_space<vmem>>, %arg5: memref<1x128xf32, #tpu.memory_space<vmem>>, %arg6: memref<128x128xf32, #tpu.memory_space<vmem>>, %arg7: memref<128x128xf32, #tpu.memory_space<vmem>>) attributes {dimension_semantics = [#tpu.dimension_semantics<parallel>, #tpu.dimension_semantics<arbitrary>], iteration_bounds = array<i64: 2, 1>, scalar_prefetch = 0 : i64, scratch_operands = 1 : i64, tpu.core_type = #tpu.core_type<tc>, window_params = [{transform_indices = @transform_0, window_bounds = array<i64: 128, 256>}, {transform_indices = @transform_1, window_bounds = array<i64: 256, 128>}, {transform_indices = @transform_2, window_bounds = array<i64: 128, 1>}, {pipeline_mode = #tpu.pipeline_mode<synchronous>, transform_indices = @transform_3, window_bounds = array<i64: 1, 128>}, {transform_indices = @transform_4, window_bounds = array<i64: 128, 128>}]} {
    %c0_i32 = arith.constant 0 : i32
    %0 = arith.cmpi eq, %arg1, %c0_i32 : i32
    %1 = arith.extui %0 : i1 to i32
    %c0_i32_0 = arith.constant 0 : i32
    %2 = arith.cmpi ne, %1, %c0_i32_0 : i32
    scf.if %2 {
      %cst_10 = arith.constant 0.000000e+00 : f32
      %13 = vector.broadcast %cst_10 : f32 to vector<128x128xf32>
      %c0_11 = arith.constant 0 : index
      %c0_12 = arith.constant 0 : index
      %14 = vector.load %arg7[%c0_11, %c0_12] : memref<128x128xf32, #tpu.memory_space<vmem>>, vector<128x128xf32>
      tpu.vector_store %arg7[%c0_11, %c0_12], %13 {strides = array<i32>} : memref<128x128xf32, #tpu.memory_space<vmem>>, vector<128x128xf32>,
    } else {
    }
    %c0 = arith.constant 0 : index
    %c0_1 = arith.constant 0 : index
    %3 = vector.load %arg2[%c0, %c0_1] : memref<128x256xi8, #tpu.memory_space<vmem>>, vector<128x256xi8>
    %4 = arith.sitofp %3 : vector<128x256xi8> to vector<128x256xbf16>
    %c0_2 = arith.constant 0 : index
    %c0_3 = arith.constant 0 : index
    %5 = vector.load %arg7[%c0_2, %c0_3] : memref<128x128xf32, #tpu.memory_space<vmem>>, vector<128x128xf32>
    %c0_4 = arith.constant 0 : index
    %c0_5 = arith.constant 0 : index
    %6 = vector.load %arg3[%c0_4, %c0_5] : memref<256x128xbf16, #tpu.memory_space<vmem>>, vector<256x128xbf16>
    %cst = arith.constant dense<0.000000e+00> : vector<128x128xf32>
    %7 = tpu.matmul %4, %6, %cst {dimension_numbers = #tpu.dot_dimension_numbers<[1], [0], [0], [1], [0, 0, 1, 1], [], []>} : vector<128x256xbf16>, vector<256x128xbf16>, vector<128x128xf32> -> vector<128x128xf32>
    %8 = arith.addf %5, %7 : vector<128x128xf32>
    %c0_6 = arith.constant 0 : index
    %c0_7 = arith.constant 0 : index
    %9 = vector.load %arg7[%c0_6, %c0_7] : memref<128x128xf32, #tpu.memory_space<vmem>>, vector<128x128xf32>
    tpu.vector_store %arg7[%c0_6, %c0_7], %8 {strides = array<i32>} : memref<128x128xf32, #tpu.memory_space<vmem>>, vector<128x128xf32>,
    %c0_i32_8 = arith.constant 0 : i32
    %10 = arith.cmpi eq, %arg1, %c0_i32_8 : i32
    %11 = arith.extui %10 : i1 to i32
    %c0_i32_9 = arith.constant 0 : i32
    %12 = arith.cmpi ne, %11, %c0_i32_9 : i32
    scf.if %12 {
      %c0_10 = arith.constant 0 : index
      %c0_11 = arith.constant 0 : index
      %13 = vector.load %arg7[%c0_10, %c0_11] : memref<128x128xf32, #tpu.memory_space<vmem>>, vector<128x128xf32>
      %c0_12 = arith.constant 0 : index
      %c0_13 = arith.constant 0 : index
      %14 = vector.load %arg4[%c0_12, %c0_13] : memref<128x1xf32, #tpu.memory_space<vmem>>, vector<128x1xf32>
      %15 = vector.broadcast %14 : vector<128x1xf32> to vector<128x128xf32>
      %16 = arith.mulf %13, %15 : vector<128x128xf32>
      %c0_14 = arith.constant 0 : index
      %c0_15 = arith.constant 0 : index
      %17 = vector.load %arg5[%c0_14, %c0_15] : memref<1x128xf32, #tpu.memory_space<vmem>>, vector<1x128xf32>
      %18 = vector.broadcast %17 : vector<1x128xf32> to vector<128x128xf32>
      %19 = arith.addf %16, %18 : vector<128x128xf32>
      %cst_16 = arith.constant 0.000000e+00 : f32
      %20 = vector.broadcast %cst_16 : f32 to vector<128x128xf32>
      %21 = arith.maximumf %19, %20 : vector<128x128xf32>
      %c0_17 = arith.constant 0 : index
      %c0_18 = arith.constant 0 : index
      %22 = vector.load %arg6[%c0_17, %c0_18] : memref<128x128xf32, #tpu.memory_space<vmem>>, vector<128x128xf32>
      tpu.vector_store %arg6[%c0_17, %c0_18], %21 {strides = array<i32>} : memref<128x128xf32, #tpu.memory_space<vmem>>, vector<128x128xf32>,
    } else {
    }
    return
  }
  func.func @transform_0(%arg0: i32, %arg1: i32) -> (i32, i32) {
    %c0_i32 = arith.constant 0 : i32
    return %arg0, %arg1 : i32, i32
  }
  func.func @transform_1(%arg0: i32, %arg1: i32) -> (i32, i32) {
    %c0_i32 = arith.constant 0 : i32
    %c0_i32_0 = arith.constant 0 : i32
    return %arg1, %c0_i32 : i32, i32
  }
  func.func @transform_2(%arg0: i32, %arg1: i32) -> (i32, i32) {
    %c0_i32 = arith.constant 0 : i32
    %c0_i32_0 = arith.constant 0 : i32
    return %arg0, %c0_i32 : i32, i32
  }
  func.func @transform_3(%arg0: i32, %arg1: i32) -> (i32, i32) {
    %c0_i32 = arith.constant 0 : i32
    %c0_i32_0 = arith.constant 0 : i32
    %c0_i32_1 = arith.constant 0 : i32
    return %c0_i32, %c0_i32_0 : i32, i32
  }
  func.func @transform_4(%arg0: i32, %arg1: i32) -> (i32, i32) {
    %c0_i32 = arith.constant 0 : i32
    %c0_i32_0 = arith.constant 0 : i32
    return %arg0, %c0_i32 : i32, i32
  }
}

</mosaic_0001>

<llo_original>
// kernel: _gcn_layer_impl.1
$region0: #{_gcn_layer_impl.1}
  #allocation0 [shape = 'u32[]', space=smem, size = 0x4, offset = 0x4, fixed_abs, tag = 'smem constant byte address 0x4 - core index']
  #allocation1 [shape = 'u32[144,128]{1,0:T(1,128)}', space=vmem, size = 0x12000, scoped, tag = 'internal scratch']
  #allocation2 [shape = 'f32[128,128]{1,0:T(8,128)}', space=vmem, size = 0x10000, scoped, tag = 'scratch operand']
  %s0 = inlined_call_operand.vmem [shape: s8[256,256], index: 0, kind: input, shape index: {}]
  %s1 = inlined_call_operand.vmem [shape: bf16[256,128], index: 1, kind: input, shape index: {}]
  %s2 = inlined_call_operand.vmem [shape: f32[256,1], index: 2, kind: input, shape index: {}]
  %s3 = inlined_call_operand.vmem [shape: f32[1,128], index: 3, kind: input, shape index: {}]
  %s4 = inlined_call_operand.vmem [shape: f32[256,128], index: 4, kind: output, shape index: {}]
  %s5 = sld [smem:[#allocation0]]
  $region57: #{_gcn_layer_impl.1} parent=0
    _
  %s7 = ssub.s32 1, %s5
  %s8 = scalar_select 0, %s7, %s5
  loop: start=0, step=1, limit=4
  $region2: #{_gcn_layer_impl.1} parent=0 // loop_pre_header
    _
  $region3: #{_gcn_layer_impl.1} parent=0 // loop_header
    %s10 = sphi 0, %s14
    %p11 = scmp.ge.s32.totalorder %s10, 4
    %s17 = sphi 0, %s29
    %s18 = sphi 0, %s25
    %s19 = sphi 0, %s17
    %s20 = sphi 0, %s18
    %s21 = sphi 0, %s19
    %s22 = sphi 0, %s20
    %s34 = sphi 0, %s36
    %s37 = sphi 0, %s34
    %s38 = sphi 0, %s37
    %s54 = sphi 0, %s38
    %s60 = sphi 0, %s62
    %s63 = sphi 0, %s60
    %s64 = sphi 0, %s63
    %s80 = sphi 0, %s64
    %s86 = sphi 0, %s88
    %s89 = sphi 0, %s86
    %s90 = sphi 0, %s89
    %s106 = sphi 0, %s90
    %s110 = sphi 0, %s110
    %s112 = sphi 0, %s110
    %s113 = sphi 0, %s112
    %s127 = sphi 0, %s113
    %s133 = sphi 0, %s135
    %s136 = sphi 0, %s133
    %s137 = sphi 0, %s136
    %s153 = sphi 0, %s137
  $region4: #{_gcn_layer_impl.1} parent=0 // loop_header_branch
    %13 = sbr.rel (%p11) target = $region8
  $region5: #{_gcn_layer_impl.1} parent=0 // loop_body
    %s15 = ssub.s32 %s10, 1
    %s16 = ssub.s32 %s10, 2
    %s23 = sadd.s32 1, %s18
    %p24 = scmp.ge.s32.totalorder %s23, 1
    %s25 = scalar_select %p24, 0, %s23
    %s26 = sadd.s32 1, %s17
    %s27 = scalar_select %p24, %s26, %s17
    %p28 = scmp.ge.s32.totalorder %s27, 2
    %s29 = scalar_select %p28, 0, %s27
    %s30 = ssub.s32 %s17, %s29
    %s31 = ssub.s32 %s18, %s25
    %s32 = sor.u32 %s30, %s31
    %p33 = scmp.eq.s32.totalorder %s32, 0
    %s35 = sadd.s32 %s34, 1
    %s36 = scalar_select %p33, %s34, %s35
    %p39 = pneg %p33
    %p40 = scmp.eq.s32.totalorder %s10, 1
    %p41 = por %p39, %p40
    %p42 = scmp.ne.s32.totalorder %s34, %s37
    %p43 = scmp.eq.s32.totalorder %s10, 0
    %p44 = por %p42, %p43
    %p45 = scmp.ne.s32.totalorder %s34, %s37
    %p46 = scmp.eq.s32.totalorder %s15, 1
    %p47 = por %p45, %p46
    %p48 = scmp.ne.s32.totalorder %s37, %s38
    %p49 = scmp.eq.s32.totalorder %s15, 0
    %p50 = por %p48, %p49
    %p51 = scmp.ne.s32.totalorder %s37, %s38
    %p52 = scmp.eq.s32.totalorder %s16, 1
    %p53 = por %p51, %p52
    %p55 = scmp.ne.s32.totalorder %s38, %s54
    %p56 = scmp.eq.s32.totalorder %s16, 0
    %p57 = por %p55, %p56
    %s58 = ssub.s32 %s18, %s25
    %p59 = scmp.eq.s32.totalorder %s58, 0
    %s61 = sadd.s32 %s60, 1
    %s62 = scalar_select %p59, %s60, %s61
    %p65 = pneg %p59
    %p66 = scmp.eq.s32.totalorder %s10, 1
    %p67 = por %p65, %p66
    %p68 = scmp.ne.s32.totalorder %s60, %s63
    %p69 = scmp.eq.s32.totalorder %s10, 0
    %p70 = por %p68, %p69
    %p71 = scmp.ne.s32.totalorder %s60, %s63
    %p72 = scmp.eq.s32.totalorder %s15, 1
    %p73 = por %p71, %p72
    %p74 = scmp.ne.s32.totalorder %s63, %s64
    %p75 = scmp.eq.s32.totalorder %s15, 0
    %p76 = por %p74, %p75
    %p77 = scmp.ne.s32.totalorder %s63, %s64
    %p78 = scmp.eq.s32.totalorder %s16, 1
    %p79 = por %p77, %p78
    %p81 = scmp.ne.s32.totalorder %s64, %s80
    %p82 = scmp.eq.s32.totalorder %s16, 0
    %p83 = por %p81, %p82
    %s84 = ssub.s32 %s17, %s29
    %p85 = scmp.eq.s32.totalorder %s84, 0
    %s87 = sadd.s32 %s86, 1
    %s88 = scalar_select %p85, %s86, %s87
    %p91 = pneg %p85
    %p92 = scmp.eq.s32.totalorder %s10, 1
    %p93 = por %p91, %p92
    %p94 = scmp.ne.s32.totalorder %s86, %s89
    %p95 = scmp.eq.s32.totalorder %s10, 0
    %p96 = por %p94, %p95
    %p97 = scmp.ne.s32.totalorder %s86, %s89
    %p98 = scmp.eq.s32.totalorder %s15, 1
    %p99 = por %p97, %p98
    %p100 = scmp.ne.s32.totalorder %s89, %s90
    %p101 = scmp.eq.s32.totalorder %s15, 0
    %p102 = por %p100, %p101
    %p103 = scmp.ne.s32.totalorder %s89, %s90
    %p104 = scmp.eq.s32.totalorder %s16, 1
    %p105 = por %p103, %p104
    %p107 = scmp.ne.s32.totalorder %s90, %s106
    %p108 = scmp.eq.s32.totalorder %s16, 0
    %p109 = por %p107, %p108
    %s111 = sadd.s32 %s110, 1
    %p114 = scmp.eq.s32.totalorder %s10, 1
    %p115 = scmp.ne.s32.totalorder %s110, %s112
    %p116 = scmp.eq.s32.totalorder %s10, 0
    %p117 = por %p115, %p116
    %p118 = scmp.ne.s32.totalorder %s110, %s112
    %p119 = scmp.eq.s32.totalorder %s15, 1
    %p120 = por %p118, %p119
    %p121 = scmp.ne.s32.totalorder %s112, %s113
    %p122 = scmp.eq.s32.totalorder %s15, 0
    %p123 = por %p121, %p122
    %p124 = scmp.ne.s32.totalorder %s112, %s113
    %p125 = scmp.eq.s32.totalorder %s16, 1
    %p126 = por %p124, %p125
    %p128 = scmp.ne.s32.totalorder %s113, %s127
    %p129 = scmp.eq.s32.totalorder %s16, 0
    %p130 = por %p128, %p129
    %s131 = ssub.s32 %s17, %s29
    %p132 = scmp.eq.s32.totalorder %s131, 0
    %s134 = sadd.s32 %s133, 1
    %s135 = scalar_select %p132, %s133, %s134
    %p138 = pneg %p132
    %p139 = scmp.eq.s32.totalorder %s10, 1
    %p140 = por %p138, %p139
    %p141 = scmp.ne.s32.totalorder %s133, %s136
    %p142 = scmp.eq.s32.totalorder %s10, 0
    %p143 = por %p141, %p142
    %p144 = scmp.ne.s32.totalorder %s133, %s136
    %p145 = scmp.eq.s32.totalorder %s15, 1
    %p146 = por %p144, %p145
    %p147 = scmp.ne.s32.totalorder %s136, %s137
    %p148 = scmp.eq.s32.totalorder %s15, 0
    %p149 = por %p147, %p148
    %p150 = scmp.ne.s32.totalorder %s136, %s137
    %p151 = scmp.eq.s32.totalorder %s16, 1
    %p152 = por %p150, %p151
    %p154 = scmp.ne.s32.totalorder %s137, %s153
    %p155 = scmp.eq.s32.totalorder %s16, 0
    %p156 = por %p154, %p155
    %p157 = scmp.le.s32.totalorder 1, %s10
    %p158 = scmp.lt.s32.totalorder %s10, 3
    %p159 = pnand %p157, %p158
    %p160 = pneg %p159
    // Predicated region
    $region9: #{_gcn_layer_impl.1} parent=5 // pred_check
      _
    $region10: #{_gcn_layer_impl.1} parent=5 // pred_check_branch
      %162 = sbr.rel (%p159) target = $region12
    $region11: #{_gcn_layer_impl.1} parent=5 // pred_region
      %s163 = ssub.s32 %s10, 1
      // Predicated region
      $region13: #{_gcn_layer_impl.1} parent=11 // pred_check
        %p164 = pneg %p76
      $region14: #{_gcn_layer_impl.1} parent=11 // pred_check_branch
        %166 = sbr.rel (%p164) target = $region16
      $region15: #{_gcn_layer_impl.1} parent=11 // pred_region
        %s167 = smul.u32 32, %s20
        %p168 = scmp.lt.s32.totalorder %s167, 31
        %s169 = scalar_select %p168, %s167, 31
        %s170 = smul.addr %s169, 4
        %s171 = scalar_lea.vmem %s1, %s170
        %s172 = smul.u32 32, %s20
      $region16: #{_gcn_layer_impl.1} parent=11 // pred_fallthru
        _
      // Predicated region
      $region17: #{_gcn_layer_impl.1} parent=11 // pred_check
        %p173 = pneg %p123
      $region18: #{_gcn_layer_impl.1} parent=11 // pred_check_branch
        %175 = sbr.rel (%p173) target = $region20
      $region19: #{_gcn_layer_impl.1} parent=11 // pred_region
        _
      $region20: #{_gcn_layer_impl.1} parent=11 // pred_fallthru
        _
    $region12: #{_gcn_layer_impl.1} parent=5 // pred_fallthru
      _
    %p176 = scmp.lt.s32.totalorder %s10, 2
    // Predicated region
    $region21: #{_gcn_layer_impl.1} parent=5 // pred_check
      %p177 = pneg %p176
    $region22: #{_gcn_layer_impl.1} parent=5 // pred_check_branch
      %179 = sbr.rel (%p177) target = $region24
    $region23: #{_gcn_layer_impl.1} parent=5 // pred_region
      // Predicated region
      $region25: #{_gcn_layer_impl.1} parent=23 // pred_check
        %p180 = pneg %p44
      $region26: #{_gcn_layer_impl.1} parent=23 // pred_check_branch
        %182 = sbr.rel (%p180) target = $region28
      $region27: #{_gcn_layer_impl.1} parent=23 // pred_region
        %s183 = smul.u32 4, %s17
        %s184 = smul.u32 2, %s18
        %p185 = scmp.lt.s32.totalorder %s183, 7
        %s186 = scalar_select %p185, %s183, 7
        %p187 = scmp.lt.s32.totalorder %s184, 1
        %s188 = scalar_select %p187, %s184, 1
        %s189 = smul.addr %s186, 2
        %s190 = sadd.s32 %s188, %s189
        %s191 = smul.addr %s190, 8
        %s192 = scalar_lea.vmem %s0, %s191
        %s193 = smul.u32 4, %s17
        %s194 = smul.u32 2, %s18
      $region28: #{_gcn_layer_impl.1} parent=23 // pred_fallthru
        _
      // Predicated region
      $region29: #{_gcn_layer_impl.1} parent=23 // pred_check
        %p195 = pneg %p96
      $region30: #{_gcn_layer_impl.1} parent=23 // pred_check_branch
        %197 = sbr.rel (%p195) target = $region32
      $region31: #{_gcn_layer_impl.1} parent=23 // pred_region
        %s198 = smul.u32 16, %s17
        %p199 = scmp.lt.s32.totalorder %s198, 31
        %s200 = scalar_select %p199, %s198, 31
        %s201 = smul.addr %s200, 8
        %s202 = scalar_lea.vmem %s2, %s201
        %s203 = smul.u32 16, %s17
      $region32: #{_gcn_layer_impl.1} parent=23 // pred_fallthru
        _
    $region24: #{_gcn_layer_impl.1} parent=5 // pred_fallthru
      _
    %p204 = scmp.le.s32.totalorder 1, %s10
    %p205 = scmp.lt.s32.totalorder %s10, 3
    %p206 = pnand %p204, %p205
    %p207 = pneg %p206
    // Predicated region
    $region33: #{_gcn_layer_impl.1} parent=5 // pred_check
      _
    $region34: #{_gcn_layer_impl.1} parent=5 // pred_check_branch
      %209 = sbr.rel (%p206) target = $region36
    $region35: #{_gcn_layer_impl.1} parent=5 // pred_region
      %s210 = ssub.s32 %s10, 1
      %s211 = smul.u32 4, %s19
      %s212 = smul.u32 2, %s20
      %p213 = scmp.lt.s32.totalorder %s211, 7
      %s214 = scalar_select %p213, %s211, 7
      %p215 = scmp.lt.s32.totalorder %s212, 1
      %s216 = scalar_select %p215, %s212, 1
      %s217 = smul.addr %s214, 2
      %s218 = sadd.s32 %s216, %s217
      %s219 = smul.addr %s218, 8
      %s220 = scalar_lea.vmem %s0, %s219
      %p221 = pneg %p50
      %p222 = pneg %p47
      %s223 = smul.u32 32, %s20
      %p224 = scmp.lt.s32.totalorder %s223, 31
      %s225 = scalar_select %p224, %s223, 31
      %s226 = smul.addr %s225, 4
      %s227 = scalar_lea.vmem %s1, %s226
      %p228 = pneg %p76
      %p229 = pneg %p73
      %s230 = smul.u32 16, %s19
      %p231 = scmp.lt.s32.totalorder %s230, 31
      %s232 = scalar_select %p231, %s230, 31
      %s233 = smul.addr %s232, 8
      %s234 = scalar_lea.vmem %s2, %s233
      %p235 = pneg %p102
      %p236 = pneg %p99
      %p237 = pneg %p123
      %p238 = pneg %p120
      %p239 = pneg %p149
      %p240 = pneg %p146
      %s241 = smul.u32 16, %s19
      %p242 = scmp.lt.s32.totalorder %s241, 31
      %s243 = scalar_select %p242, %s241, 31
      %s244 = smul.addr %s243, 8
      %s245 = scalar_lea.vmem %s4, %s244
      %s246 = smul.u32 4, %s19
      %s247 = smul.u32 2, %s20
      %p248 = scmp.lt.s32.totalorder %s246, 7
      %s249 = scalar_select %p248, %s246, 7
      %p250 = scmp.lt.s32.totalorder %s247, 1
      %s251 = scalar_select %p250, %s247, 1
      %s252 = smul.addr %s249, 2
      %s253 = sadd.s32 %s251, %s252
      %s254 = smul.addr %s253, 8
      %s255 = scalar_lea.vmem %s0, %s254
      %s256 = smul.u32 4, %s19
      %s257 = smul.u32 2, %s20
      %s258 = smul.u32 32, %s20
      %p259 = scmp.lt.s32.totalorder %s258, 31
      %s260 = scalar_select %p259, %s258, 31
      %s261 = smul.addr %s260, 4
      %s262 = scalar_lea.vmem %s1, %s261
      %s263 = smul.u32 32, %s20
      %s264 = smul.u32 16, %s19
      %p265 = scmp.lt.s32.totalorder %s264, 31
      %s266 = scalar_select %p265, %s264, 31
      %s267 = smul.addr %s266, 8
      %s268 = scalar_lea.vmem %s2, %s267
      %s269 = smul.u32 16, %s19
      %s270 = smul.u32 16, %s19
      %p271 = scmp.lt.s32.totalorder %s270, 31
      %s272 = scalar_select %p271, %s270, 31
      %s273 = smul.addr %s272, 8
      %s274 = scalar_lea.vmem %s4, %s273
      %s275 = smul.u32 16, %s19
      %p277 = scmp.eq.s32.totalorder %s20, 0
      // Predicated region
      $region37: #{_gcn_layer_impl.1} parent=35 // pred_check
        %p278 = pneg %p277
      $region38: #{_gcn_layer_impl.1} parent=35 // pred_check_branch
        %280 = sbr.rel (%p278) target = $region40
      $region39: #{_gcn_layer_impl.1} parent=35 // pred_region
        %281 = vst [vmem:[#allocation2] sm:$0xff] 0.0
        %282 = vst [vmem:[#allocation2 + $0x8] sm:$0xff] 0.0
        %283 = vst [vmem:[#allocation2 + $0x10] sm:$0xff] 0.0
        %284 = vst [vmem:[#allocation2 + $0x18] sm:$0xff] 0.0
        %285 = vst [vmem:[#allocation2 + $0x20] sm:$0xff] 0.0
        %286 = vst [vmem:[#allocation2 + $0x28] sm:$0xff] 0.0
        %287 = vst [vmem:[#allocation2 + $0x30] sm:$0xff] 0.0
        %288 = vst [vmem:[#allocation2 + $0x38] sm:$0xff] 0.0
        %289 = vst [vmem:[#allocation2 + $0x40] sm:$0xff] 0.0
        %290 = vst [vmem:[#allocation2 + $0x48] sm:$0xff] 0.0
        %291 = vst [vmem:[#allocation2 + $0x50] sm:$0xff] 0.0
        %292 = vst [vmem:[#allocation2 + $0x58] sm:$0xff] 0.0
        %293 = vst [vmem:[#allocation2 + $0x60] sm:$0xff] 0.0
        %294 = vst [vmem:[#allocation2 + $0x68] sm:$0xff] 0.0
        %295 = vst [vmem:[#allocation2 + $0x70] sm:$0xff] 0.0
        %296 = vst [vmem:[#allocation2 + $0x78] sm:$0xff] 0.0
      $region40: #{_gcn_layer_impl.1} parent=35 // pred_fallthru
        _
      %v297 = vld [vmem:[%s255] sm:$0xff]
      %v298 = vld [vmem:[%s255 + $0x8] sm:$0xff]
      %v299 = vld [vmem:[%s255 + $0x10] sm:$0xff]
      %v300 = vld [vmem:[%s255 + $0x18] sm:$0xff]
      %v301 = vld [vmem:[%s255 + $0x20] sm:$0xff]
      %v302 = vld [vmem:[%s255 + $0x28] sm:$0xff]
      %v303 = vld [vmem:[%s255 + $0x30] sm:$0xff]
      %v304 = vld [vmem:[%s255 + $0x38] sm:$0xff]
      %v305 = vunpack.c.l.s8.bf16 %v297
      %v306 = vunpack.c.l.s8.bf16 %v298
      %v307 = vunpack.c.h.s8.bf16 %v297
      %v308 = vunpack.c.h.s8.bf16 %v298
      %v309 = vunpack.c.l.s8.bf16 %v299
      %v310 = vunpack.c.l.s8.bf16 %v300
      %v311 = vunpack.c.h.s8.bf16 %v299
      %v312 = vunpack.c.h.s8.bf16 %v300
      %v313 = vunpack.c.l.s8.bf16 %v301
      %v314 = vunpack.c.l.s8.bf16 %v302
      %v315 = vunpack.c.h.s8.bf16 %v301
      %v316 = vunpack.c.h.s8.bf16 %v302
      %v317 = vunpack.c.l.s8.bf16 %v303
      %v318 = vunpack.c.l.s8.bf16 %v304
      %v319 = vunpack.c.h.s8.bf16 %v303
      %v320 = vunpack.c.h.s8.bf16 %v304
      %v321 = vld [vmem:[#allocation2] sm:$0xff]
      %v322 = vld [vmem:[#allocation2 + $0x8] sm:$0xff]
      %v323 = vld [vmem:[#allocation2 + $0x10] sm:$0xff]
      %v324 = vld [vmem:[#allocation2 + $0x18] sm:$0xff]
      %v325 = vld [vmem:[#allocation2 + $0x20] sm:$0xff]
      %v326 = vld [vmem:[#allocation2 + $0x28] sm:$0xff]
      %v327 = vld [vmem:[#allocation2 + $0x30] sm:$0xff]
      %v328 = vld [vmem:[#allocation2 + $0x38] sm:$0xff]
      %v329 = vld [vmem:[#allocation2 + $0x40] sm:$0xff]
      %v330 = vld [vmem:[#allocation2 + $0x48] sm:$0xff]
      %v331 = vld [vmem:[#allocation2 + $0x50] sm:$0xff]
      %v332 = vld [vmem:[#allocation2 + $0x58] sm:$0xff]
      %v333 = vld [vmem:[#allocation2 + $0x60] sm:$0xff]
      %v334 = vld [vmem:[#allocation2 + $0x68] sm:$0xff]
      %v335 = vld [vmem:[#allocation2 + $0x70] sm:$0xff]
      %v336 = vld [vmem:[#allocation2 + $0x78] sm:$0xff]
      %v337 = vld [vmem:[%s262] sm:$0xf]
      %v338 = vld [vmem:[%s262 + $0x4] sm:$0xf]
      %v339 = vld [vmem:[%s262 + $0x8] sm:$0xf]
      %v340 = vld [vmem:[%s262 + $0xc] sm:$0xf]
      %v341 = vld [vmem:[%s262 + $0x10] sm:$0xf]
      %v342 = vld [vmem:[%s262 + $0x14] sm:$0xf]
      %v343 = vld [vmem:[%s262 + $0x18] sm:$0xf]
      %v344 = vld [vmem:[%s262 + $0x1c] sm:$0xf]
      %v345 = vld [vmem:[%s262 + $0x20] sm:$0xf]
      %v346 = vld [vmem:[%s262 + $0x24] sm:$0xf]
      %v347 = vld [vmem:[%s262 + $0x28] sm:$0xf]
      %v348 = vld [vmem:[%s262 + $0x2c] sm:$0xf]
      %v349 = vld [vmem:[%s262 + $0x30] sm:$0xf]
      %v350 = vld [vmem:[%s262 + $0x34] sm:$0xf]
      %v351 = vld [vmem:[%s262 + $0x38] sm:$0xf]
      %v352 = vld [vmem:[%s262 + $0x3c] sm:$0xf]
      %v353 = vld [vmem:[%s262 + $0x40] sm:$0xf]
      %v354 = vld [vmem:[%s262 + $0x44] sm:$0xf]
      %v355 = vld [vmem:[%s262 + $0x48] sm:$0xf]
      %v356 = vld [vmem:[%s262 + $0x4c] sm:$0xf]
      %v357 = vld [vmem:[%s262 + $0x50] sm:$0xf]
      %v358 = vld [vmem:[%s262 + $0x54] sm:$0xf]
      %v359 = vld [vmem:[%s262 + $0x58] sm:$0xf]
      %v360 = vld [vmem:[%s262 + $0x5c] sm:$0xf]
      %v361 = vld [vmem:[%s262 + $0x60] sm:$0xf]
      %v362 = vld [vmem:[%s262 + $0x64] sm:$0xf]
      %v363 = vld [vmem:[%s262 + $0x68] sm:$0xf]
      %v364 = vld [vmem:[%s262 + $0x6c] sm:$0xf]
      %v365 = vld [vmem:[%s262 + $0x70] sm:$0xf]
      %v366 = vld [vmem:[%s262 + $0x74] sm:$0xf]
      %v367 = vld [vmem:[%s262 + $0x78] sm:$0xf]
      %v368 = vld [vmem:[%s262 + $0x7c] sm:$0xf]
      %v401 = vunpack.c.l.b16 %v337
      %v402 = vunpack.c.l.b16 %v338
      %v403 = vunpack.c.l.b16 %v339
      %v404 = vunpack.c.l.b16 %v340
      %v405 = vunpack.c.l.b16 %v341
      %v406 = vunpack.c.l.b16 %v342
      %v407 = vunpack.c.l.b16 %v343
      %v408 = vunpack.c.l.b16 %v344
      %v409 = vunpack.c.l.b16 %v345
      %v410 = vunpack.c.l.b16 %v346
      %v411 = vunpack.c.l.b16 %v347
      %v412 = vunpack.c.l.b16 %v348
      %v413 = vunpack.c.l.b16 %v349
      %v414 = vunpack.c.l.b16 %v350
      %v415 = vunpack.c.l.b16 %v351
      %v416 = vunpack.c.l.b16 %v352
      %v417 = vunpack.c.l.b16 %v353
      %v418 = vunpack.c.l.b16 %v354
      %v419 = vunpack.c.l.b16 %v355
      %v420 = vunpack.c.l.b16 %v356
      %v421 = vunpack.c.l.b16 %v357
      %v422 = vunpack.c.l.b16 %v358
      %v423 = vunpack.c.l.b16 %v359
      %v424 = vunpack.c.l.b16 %v360
      %v425 = vunpack.c.l.b16 %v361
      %v426 = vunpack.c.l.b16 %v362
      %v427 = vunpack.c.l.b16 %v363
      %v428 = vunpack.c.l.b16 %v364
      %v429 = vunpack.c.l.b16 %v365
      %v430 = vunpack.c.l.b16 %v366
      %v431 = vunpack.c.l.b16 %v367
      %v432 = vunpack.c.l.b16 %v368
      %v433 = vpack.c.b16 %v402, %v401
      %v434 = vpack.c.b16 %v404, %v403
      %v435 = vpack.c.b16 %v406, %v405
      %v436 = vpack.c.b16 %v408, %v407
      %v437 = vpack.c.b16 %v410, %v409
      %v438 = vpack.c.b16 %v412, %v411
      %v439 = vpack.c.b16 %v414, %v413
      %v440 = vpack.c.b16 %v416, %v415
      %v441 = vpack.c.b16 %v418, %v417
      %v442 = vpack.c.b16 %v420, %v419
      %v443 = vpack.c.b16 %v422, %v421
      %v444 = vpack.c.b16 %v424, %v423
      %v445 = vpack.c.b16 %v426, %v425
      %v446 = vpack.c.b16 %v428, %v427
      %v447 = vpack.c.b16 %v430, %v429
      %v448 = vpack.c.b16 %v432, %v431
      %465 = vmatprep.subr.bf16.mxu0 0
      %466 = vmatpush1.bf16.msra.mxu0 %v440
      %467 = vmatprep.subr.bf16.mxu0 0
      %468 = vmatpush1.bf16.msra.mxu0 %v439
      %469 = vmatprep.subr.bf16.mxu0 0
      %470 = vmatpush1.bf16.msra.mxu0 %v438
      %471 = vmatprep.subr.bf16.mxu0 0
      %472 = vmatpush1.bf16.msra.mxu0 %v437
      %473 = vmatprep.subr.bf16.mxu0 0
      %474 = vmatpush1.bf16.msra.mxu0 %v436
      %475 = vmatprep.subr.bf16.mxu0 0
      %476 = vmatpush1.bf16.msra.mxu0 %v435
      %477 = vmatprep.subr.bf16.mxu0 0
      %478 = vmatpush1.bf16.msra.mxu0 %v434
      %479 = vmatprep.subr.bf16.mxu0 0
      %480 = vmatpush1.bf16.msra.mxu0 %v433
      %481 = vmatprep.subr.bf16.mxu0 0
      %482 = vmatpush2.bf16.msra.mxu0 %v448
      %483 = vmatprep.subr.bf16.mxu0 0
      %484 = vmatpush2.bf16.msra.mxu0 %v447
      %485 = vmatprep.subr.bf16.mxu0 0
      %486 = vmatpush2.bf16.msra.mxu0 %v446
      %487 = vmatprep.subr.bf16.mxu0 0
      %488 = vmatpush2.bf16.msra.mxu0 %v445
      %489 = vmatprep.subr.bf16.mxu0 0
      %490 = vmatpush2.bf16.msra.mxu0 %v444
      %491 = vmatprep.subr.bf16.mxu0 0
      %492 = vmatpush2.bf16.msra.mxu0 %v443
      %493 = vmatprep.subr.bf16.mxu0 0
      %494 = vmatpush2.bf16.msra.mxu0 %v442
      %495 = vmatprep.subr.bf16.mxu0 0
      %496 = vmatpush2.bf16.msra.mxu0 %v441
      %497 = vmatprep.mubr.bf16.mxu0 %v306
      %498 = vmatmul.mubr.bf16.gmra.mxu0 %v305
      %v499 = vpop.f32.mrf.mxu0
      %v500 = vadd.f32 0.0, %v499
      %v501 = vpop.f32.mrf.mxu0
      %v502 = vpop.f32.mrf.mxu0
      %v503 = vadd.f32 0.0, %v502
      %v504 = vpop.f32.mrf.mxu0
      %505 = vmatprep.mubr.bf16.mxu0 %v308
      %506 = vmatmul.mubr.bf16.gmra.mxu0 %v307
      %v507 = vpop.f32.mrf.mxu0
      %v508 = vadd.f32 0.0, %v507
      %v509 = vpop.f32.mrf.mxu0
      %v510 = vpop.f32.mrf.mxu0
      %v511 = vadd.f32 0.0, %v510
      %v512 = vpop.f32.mrf.mxu0
      %513 = vmatprep.mubr.bf16.mxu0 %v310
      %514 = vmatmul.mubr.bf16.gmra.mxu0 %v309
      %v515 = vpop.f32.mrf.mxu0
      %v516 = vadd.f32 0.0, %v515
      %v517 = vpop.f32.mrf.mxu0
      %v518 = vpop.f32.mrf.mxu0
      %v519 = vadd.f32 0.0, %v518
      %v520 = vpop.f32.mrf.mxu0
      %521 = vmatprep.mubr.bf16.mxu0 %v312
      %522 = vmatmul.mubr.bf16.gmra.mxu0 %v311
      %v523 = vpop.f32.mrf.mxu0
      %v524 = vadd.f32 0.0, %v523
      %v525 = vpop.f32.mrf.mxu0
      %v526 = vpop.f32.mrf.mxu0
      %v527 = vadd.f32 0.0, %v526
      %v528 = vpop.f32.mrf.mxu0
      %529 = vmatprep.mubr.bf16.mxu0 %v314
      %530 = vmatmul.mubr.bf16.gmra.mxu0 %v313
      %v531 = vpop.f32.mrf.mxu0
      %v532 = vadd.f32 0.0, %v531
      %v533 = vpop.f32.mrf.mxu0
      %v534 = vpop.f32.mrf.mxu0
      %v535 = vadd.f32 0.0, %v534
      %v536 = vpop.f32.mrf.mxu0
      %537 = vmatprep.mubr.bf16.mxu0 %v316
      %538 = vmatmul.mubr.bf16.gmra.mxu0 %v315
      %v539 = vpop.f32.mrf.mxu0
      %v540 = vadd.f32 0.0, %v539
      %v541 = vpop.f32.mrf.mxu0
      %v542 = vpop.f32.mrf.mxu0
      %v543 = vadd.f32 0.0, %v542
      %v544 = vpop.f32.mrf.mxu0
      %545 = vmatprep.mubr.bf16.mxu0 %v318
      %546 = vmatmul.mubr.bf16.gmra.mxu0 %v317
      %v547 = vpop.f32.mrf.mxu0
      %v548 = vadd.f32 0.0, %v547
      %v549 = vpop.f32.mrf.mxu0
      %v550 = vpop.f32.mrf.mxu0
      %v551 = vadd.f32 0.0, %v550
      %v552 = vpop.f32.mrf.mxu0
      %553 = vmatprep.mubr.bf16.mxu0 %v320
      %554 = vmatmul.mubr.bf16.gmra.mxu0 %v319
      %v555 = vpop.f32.mrf.mxu0
      %v556 = vadd.f32 0.0, %v555
      %v557 = vpop.f32.mrf.mxu0
      %v558 = vpop.f32.mrf.mxu0
      %v559 = vadd.f32 0.0, %v558
      %v560 = vpop.f32.mrf.mxu0
      %561 = vdwg.mxu0
      %v562 = vadd.f32 %v321, %v500
      %v563 = vadd.f32 %v322, %v503
      %v564 = vadd.f32 %v323, %v508
      %v565 = vadd.f32 %v324, %v511
      %v566 = vadd.f32 %v325, %v516
      %v567 = vadd.f32 %v326, %v519
      %v568 = vadd.f32 %v327, %v524
      %v569 = vadd.f32 %v328, %v527
      %v570 = vadd.f32 %v329, %v532
      %v571 = vadd.f32 %v330, %v535
      %v572 = vadd.f32 %v331, %v540
      %v573 = vadd.f32 %v332, %v543
      %v574 = vadd.f32 %v333, %v548
      %v575 = vadd.f32 %v334, %v551
      %v576 = vadd.f32 %v335, %v556
      %v577 = vadd.f32 %v336, %v559
      %578 = vst [vmem:[#allocation2] sm:$0xff] %v562
      %579 = vst [vmem:[#allocation2 + $0x8] sm:$0xff] %v563
      %580 = vst [vmem:[#allocation2 + $0x10] sm:$0xff] %v564
      %581 = vst [vmem:[#allocation2 + $0x18] sm:$0xff] %v565
      %582 = vst [vmem:[#allocation2 + $0x20] sm:$0xff] %v566
      %583 = vst [vmem:[#allocation2 + $0x28] sm:$0xff] %v567
      %584 = vst [vmem:[#allocation2 + $0x30] sm:$0xff] %v568
      %585 = vst [vmem:[#allocation2 + $0x38] sm:$0xff] %v569
      %586 = vst [vmem:[#allocation2 + $0x40] sm:$0xff] %v570
      %587 = vst [vmem:[#allocation2 + $0x48] sm:$0xff] %v571
      %588 = vst [vmem:[#allocation2 + $0x50] sm:$0xff] %v572
      %589 = vst [vmem:[#allocation2 + $0x58] sm:$0xff] %v573
      %590 = vst [vmem:[#allocation2 + $0x60] sm:$0xff] %v574
      %591 = vst [vmem:[#allocation2 + $0x68] sm:$0xff] %v575
      %592 = vst [vmem:[#allocation2 + $0x70] sm:$0xff] %v576
      %593 = vst [vmem:[#allocation2 + $0x78] sm:$0xff] %v577
      // Predicated region
      $region41: #{_gcn_layer_impl.1} parent=35 // pred_check
        %p594 = pneg %p277
      $region42: #{_gcn_layer_impl.1} parent=35 // pred_check_branch
        %596 = sbr.rel (%p594) target = $region44
      $region43: #{_gcn_layer_impl.1} parent=35 // pred_region
        %v597 = vld [vmem:[#allocation2] sm:$0xff]
        %v598 = vld [vmem:[#allocation2 + $0x8] sm:$0xff]
        %v599 = vld [vmem:[#allocation2 + $0x10] sm:$0xff]
        %v600 = vld [vmem:[#allocation2 + $0x18] sm:$0xff]
        %v601 = vld [vmem:[#allocation2 + $0x20] sm:$0xff]
        %v602 = vld [vmem:[#allocation2 + $0x28] sm:$0xff]
        %v603 = vld [vmem:[#allocation2 + $0x30] sm:$0xff]
        %v604 = vld [vmem:[#allocation2 + $0x38] sm:$0xff]
        %v605 = vld [vmem:[#allocation2 + $0x40] sm:$0xff]
        %v606 = vld [vmem:[#allocation2 + $0x48] sm:$0xff]
        %v607 = vld [vmem:[#allocation2 + $0x50] sm:$0xff]
        %v608 = vld [vmem:[#allocation2 + $0x58] sm:$0xff]
        %v609 = vld [vmem:[#allocation2 + $0x60] sm:$0xff]
        %v610 = vld [vmem:[#allocation2 + $0x68] sm:$0xff]
        %v611 = vld [vmem:[#allocation2 + $0x70] sm:$0xff]
        %v612 = vld [vmem:[#allocation2 + $0x78] sm:$0xff]
        %v613 = vld [vmem:[%s268] sm:$0xff]
        %v614 = vld [vmem:[%s268 + $0x8] sm:$0xff]
        %v615 = vld [vmem:[%s268 + $0x10] sm:$0xff]
        %v616 = vld [vmem:[%s268 + $0x18] sm:$0xff]
        %v617 = vld [vmem:[%s268 + $0x20] sm:$0xff]
        %v618 = vld [vmem:[%s268 + $0x28] sm:$0xff]
        %v619 = vld [vmem:[%s268 + $0x30] sm:$0xff]
        %v620 = vld [vmem:[%s268 + $0x38] sm:$0xff]
        %v621 = vld [vmem:[%s268 + $0x40] sm:$0xff]
        %v622 = vld [vmem:[%s268 + $0x48] sm:$0xff]
        %v623 = vld [vmem:[%s268 + $0x50] sm:$0xff]
        %v624 = vld [vmem:[%s268 + $0x58] sm:$0xff]
        %v625 = vld [vmem:[%s268 + $0x60] sm:$0xff]
        %v626 = vld [vmem:[%s268 + $0x68] sm:$0xff]
        %v627 = vld [vmem:[%s268 + $0x70] sm:$0xff]
        %v628 = vld [vmem:[%s268 + $0x78] sm:$0xff]
        %630 = vset.pattern.permute.xlu0 0
        %631 = vperm.xlu0 %630, %v613
        %v632 = vpop.permute.xlu0 %631
        %635 = vset.pattern.permute.xlu0 0
        %636 = vperm.xlu0 %635, %v614
        %v637 = vpop.permute.xlu0 %636
        %640 = vset.pattern.permute.xlu0 0
        %641 = vperm.xlu0 %640, %v615
        %v642 = vpop.permute.xlu0 %641
        %645 = vset.pattern.permute.xlu0 0
        %646 = vperm.xlu0 %645, %v616
        %v647 = vpop.permute.xlu0 %646
        %650 = vset.pattern.permute.xlu0 0
        %651 = vperm.xlu0 %650, %v617
        %v652 = vpop.permute.xlu0 %651
        %655 = vset.pattern.permute.xlu0 0
        %656 = vperm.xlu0 %655, %v618
        %v657 = vpop.permute.xlu0 %656
        %660 = vset.pattern.permute.xlu0 0
        %661 = vperm.xlu0 %660, %v619
        %v662 = vpop.permute.xlu0 %661
        %665 = vset.pattern.permute.xlu0 0
        %666 = vperm.xlu0 %665, %v620
        %v667 = vpop.permute.xlu0 %666
        %670 = vset.pattern.permute.xlu0 0
        %671 = vperm.xlu0 %670, %v621
        %v672 = vpop.permute.xlu0 %671
        %675 = vset.pattern.permute.xlu0 0
        %676 = vperm.xlu0 %675, %v622
        %v677 = vpop.permute.xlu0 %676
        %680 = vset.pattern.permute.xlu0 0
        %681 = vperm.xlu0 %680, %v623
        %v682 = vpop.permute.xlu0 %681
        %685 = vset.pattern.permute.xlu0 0
        %686 = vperm.xlu0 %685, %v624
        %v687 = vpop.permute.xlu0 %686
        %690 = vset.pattern.permute.xlu0 0
        %691 = vperm.xlu0 %690, %v625
        %v692 = vpop.permute.xlu0 %691
        %695 = vset.pattern.permute.xlu0 0
        %696 = vperm.xlu0 %695, %v626
        %v697 = vpop.permute.xlu0 %696
        %700 = vset.pattern.permute.xlu0 0
        %701 = vperm.xlu0 %700, %v627
        %v702 = vpop.permute.xlu0 %701
        %705 = vset.pattern.permute.xlu0 0
        %706 = vperm.xlu0 %705, %v628
        %v707 = vpop.permute.xlu0 %706
        %v709 = vmul.f32 %v597, %v632
        %v710 = vmul.f32 %v598, %v637
        %v711 = vmul.f32 %v599, %v642
        %v712 = vmul.f32 %v600, %v647
        %v713 = vmul.f32 %v601, %v652
        %v714 = vmul.f32 %v602, %v657
        %v715 = vmul.f32 %v603, %v662
        %v716 = vmul.f32 %v604, %v667
        %v717 = vmul.f32 %v605, %v672
        %v718 = vmul.f32 %v606, %v677
        %v719 = vmul.f32 %v607, %v682
        %v720 = vmul.f32 %v608, %v687
        %v721 = vmul.f32 %v609, %v692
        %v722 = vmul.f32 %v610, %v697
        %v723 = vmul.f32 %v611, %v702
        %v724 = vmul.f32 %v612, %v707
        %v725 = vld [vmem:[%s3] sm:$0x1]
        %v727 = vlaneseq
        %v728 = vshrl.u32 %v727, 7
        %v729 = vsub.s32 0, %v728
        %v730 = vrot.slane %v725, %v729
        %v732 = vadd.f32 %v709, %v730
        %v733 = vadd.f32 %v710, %v730
        %v734 = vadd.f32 %v711, %v730
        %v735 = vadd.f32 %v712, %v730
        %v736 = vadd.f32 %v713, %v730
        %v737 = vadd.f32 %v714, %v730
        %v738 = vadd.f32 %v715, %v730
        %v739 = vadd.f32 %v716, %v730
        %v740 = vadd.f32 %v717, %v730
        %v741 = vadd.f32 %v718, %v730
        %v742 = vadd.f32 %v719, %v730
        %v743 = vadd.f32 %v720, %v730
        %v744 = vadd.f32 %v721, %v730
        %v745 = vadd.f32 %v722, %v730
        %v746 = vadd.f32 %v723, %v730
        %v747 = vadd.f32 %v724, %v730
        %v748 = vmax.f32 %v732, 0.0
        %v749 = vmax.f32 %v733, 0.0
        %v750 = vmax.f32 %v734, 0.0
        %v751 = vmax.f32 %v735, 0.0
        %v752 = vmax.f32 %v736, 0.0
        %v753 = vmax.f32 %v737, 0.0
        %v754 = vmax.f32 %v738, 0.0
        %v755 = vmax.f32 %v739, 0.0
        %v756 = vmax.f32 %v740, 0.0
        %v757 = vmax.f32 %v741, 0.0
        %v758 = vmax.f32 %v742, 0.0
        %v759 = vmax.f32 %v743, 0.0
        %v760 = vmax.f32 %v744, 0.0
        %v761 = vmax.f32 %v745, 0.0
        %v762 = vmax.f32 %v746, 0.0
        %v763 = vmax.f32 %v747, 0.0
        %764 = vst [vmem:[%s274] sm:$0xff] %v748
        %765 = vst [vmem:[%s274 + $0x8] sm:$0xff] %v749
        %766 = vst [vmem:[%s274 + $0x10] sm:$0xff] %v750
        %767 = vst [vmem:[%s274 + $0x18] sm:$0xff] %v751
        %768 = vst [vmem:[%s274 + $0x20] sm:$0xff] %v752
        %769 = vst [vmem:[%s274 + $0x28] sm:$0xff] %v753
        %770 = vst [vmem:[%s274 + $0x30] sm:$0xff] %v754
        %771 = vst [vmem:[%s274 + $0x38] sm:$0xff] %v755
        %772 = vst [vmem:[%s274 + $0x40] sm:$0xff] %v756
        %773 = vst [vmem:[%s274 + $0x48] sm:$0xff] %v757
        %774 = vst [vmem:[%s274 + $0x50] sm:$0xff] %v758
        %775 = vst [vmem:[%s274 + $0x58] sm:$0xff] %v759
        %776 = vst [vmem:[%s274 + $0x60] sm:$0xff] %v760
        %777 = vst [vmem:[%s274 + $0x68] sm:$0xff] %v761
        %778 = vst [vmem:[%s274 + $0x70] sm:$0xff] %v762
        %779 = vst [vmem:[%s274 + $0x78] sm:$0xff] %v763
      $region44: #{_gcn_layer_impl.1} parent=35 // pred_fallthru
        _
      %s780 = smul.u32 16, %s19
      %p781 = scmp.lt.s32.totalorder %s780, 31
      %s782 = scalar_select %p781, %s780, 31
      %s783 = smul.addr %s782, 8
      %s784 = scalar_lea.vmem %s4, %s783
      // Predicated region
      $region45: #{_gcn_layer_impl.1} parent=35 // pred_check
        %p785 = pneg %p146
      $region46: #{_gcn_layer_impl.1} parent=35 // pred_check_branch
        %787 = sbr.rel (%p785) target = $region48
      $region47: #{_gcn_layer_impl.1} parent=35 // pred_region
        %s788 = smul.u32 16, %s19
      $region48: #{_gcn_layer_impl.1} parent=35 // pred_fallthru
        _
    $region36: #{_gcn_layer_impl.1} parent=5 // pred_fallthru
      _
    %p789 = scmp.le.s32.totalorder 2, %s10
    // Predicated region
    $region49: #{_gcn_layer_impl.1} parent=5 // pred_check
      %p790 = pneg %p789
    $region50: #{_gcn_layer_impl.1} parent=5 // pred_check_branch
      %792 = sbr.rel (%p790) target = $region52
    $region51: #{_gcn_layer_impl.1} parent=5 // pred_region
      %s793 = ssub.s32 %s10, 2
      // Predicated region
      $region53: #{_gcn_layer_impl.1} parent=51 // pred_check
        %p794 = pneg %p152
      $region54: #{_gcn_layer_impl.1} parent=51 // pred_check_branch
        %796 = sbr.rel (%p794) target = $region56
      $region55: #{_gcn_layer_impl.1} parent=51 // pred_region
        %s797 = smul.u32 16, %s21
        %p798 = scmp.lt.s32.totalorder %s797, 31
        %s799 = scalar_select %p798, %s797, 31
        %s800 = smul.addr %s799, 8
        %s801 = scalar_lea.vmem %s4, %s800
      $region56: #{_gcn_layer_impl.1} parent=51 // pred_fallthru
        _
    $region52: #{_gcn_layer_impl.1} parent=5 // pred_fallthru
      _
  $region6: #{_gcn_layer_impl.1} parent=0 // loop_footer
    %s14 = sadd.s32 1, %s10
  $region7: #{_gcn_layer_impl.1} parent=0 // loop_footer_branch
    %9 = sbr.rel target = $region3
  $region8: #{_gcn_layer_impl.1} parent=0 // loop_exit
    _

</llo_original>
